<compile_context>
chip_gen: v6e
topology: v6e:2x2x1
jax: 0.10.0
libtpu: 0.0.40
codegen_flags: <defaults>
</compile_context>

<pallas_src>
import functools

import jax
import jax.numpy as jnp
from jax.experimental import pallas as pl
from jax.experimental.pallas import tpu as pltpu

TILE_N = 2048   # lanes of labels processed per grid step (multiple of 128)


# ----------------------------------------------------------------------------
# Kernel: confusion-matrix accumulation over an N-grid
# ----------------------------------------------------------------------------
def _confusion_kernel(n_ref, t_ref, p_ref, conf_ref):
    i = pl.program_id(0)

    @pl.when(i == 0)
    def _init():
        conf_ref[...] = jnp.zeros_like(conf_ref)

    t = t_ref[...]                                   # (1, TILE_N) int32
    p = p_ref[...]                                   # (1, TILE_N) int32
    k_pad = conf_ref.shape[0]

    # Mask lanes beyond the real batch (ragged last tile / block > array).
    lane = jax.lax.broadcasted_iota(jnp.int32, (1, TILE_N), 1)
    valid = (i * TILE_N + lane) < n_ref[0]           # (1, TILE_N) bool

    classes = jax.lax.broadcasted_iota(jnp.int32, (k_pad, TILE_N), 0)
    # bf16 one-hots: exact 0/1 values, MXU-native input width.
    # Masking t_oh alone is sufficient: invalid lanes contribute 0 to the
    # product regardless of whatever garbage sits in the padded p lanes.
    t_oh = ((t == classes) & valid).astype(jnp.bfloat16)     # (k_pad, TILE_N)
    p_oh = (p == classes).astype(jnp.bfloat16)               # (k_pad, TILE_N)

    # C[i, j] += #{ n : target_n == i and pred_n == j }  -> one MXU matmul.
    c = jax.lax.dot_general(
        t_oh, p_oh,
        dimension_numbers=(((1,), (1,)), ((), ())),
        preferred_element_type=jnp.float32)                  # (k_pad, k_pad)

    conf_ref[...] += c.astype(jnp.int32)             # exact int32 accumulation


# ----------------------------------------------------------------------------
# Python wrappers (mirror Module.result_evaluation_mini_batch / Module.metrics)
# ----------------------------------------------------------------------------
@functools.partial(jax.jit, static_argnames=("num_classes",))
def result_evaluation_mini_batch(pred, target, num_classes):
    assert pred.shape == target.shape
    n = int(pred.shape[0])
    k_pad = max(8, ((num_classes + 7) // 8) * 8)     # sublane-friendly class pad

    t = target.astype(jnp.int32).reshape(1, n)
    p = pred.astype(jnp.int32).reshape(1, n)
    n_arr = jnp.array([n], jnp.int32)                # scalar-prefetch (SMEM)

    grid = (pl.cdiv(n, TILE_N),)

    conf_pad = pl.pallas_call(
        _confusion_kernel,
        out_shape=jax.ShapeDtypeStruct((k_pad, k_pad), jnp.int32),
        grid_spec=pltpu.PrefetchScalarGridSpec(
            num_scalar_prefetch=1,
            grid=grid,
            in_specs=[
                pl.BlockSpec((1, TILE_N), lambda i, n_ref: (0, i)),
                pl.BlockSpec((1, TILE_N), lambda i, n_ref: (0, i)),
            ],
            out_specs=pl.BlockSpec((k_pad, k_pad), lambda i, n_ref: (0, 0)),
        ),
        compiler_params=pltpu.CompilerParams(
            dimension_semantics=("arbitrary",)),
    )(n_arr, t, p)

    conf = conf_pad[:num_classes, :num_classes]

    # accuracy = trace / total — tiny reduction, fused into the same jit.
    correct = jnp.trace(conf).astype(jnp.float32)
    total = jnp.sum(conf).astype(jnp.float32)
    accuracy = correct / jnp.maximum(total, 1.0)     # guard empty batch

    return {"accuracy": accuracy, "confusion": conf}


def metrics(confusion_matrix):
    # Mirrors Module.metrics: only defined for K > 2.  Pure JAX — a pallas_call
    # for a KxK reduction is 100% launch overhead.
    rtn = {}
    if confusion_matrix.shape[0] > 2:
        c = confusion_matrix.astype(jnp.float32)
        correct = jnp.trace(c)
        wrong = jnp.sum(c) - correct
        rtn["accuracy"] = correct / jnp.maximum(correct + wrong, 1.0)
    return rtn


# ----------------------------------------------------------------------------
# Self-test
# ----------------------------------------------------------------------------
def _check(pred, target, num_classes):
    res = result_evaluation_mini_batch(pred, target, num_classes)
    conf = jax.block_until_ready(res["confusion"])
    acc = jax.block_until_ready(res["accuracy"])

    m = metrics(conf)
    if num_classes > 2:
        acc2 = jax.block_until_ready(m["accuracy"])
    else:
        assert m == {}
        acc2 = acc

    ref_acc = jnp.mean((pred == target).astype(jnp.float32))
    ref_conf = jnp.zeros((num_classes, num_classes), jnp.int32).at[target, pred].add(1)

    assert jnp.allclose(acc, ref_acc, atol=1e-6)
    assert jnp.allclose(acc2, ref_acc, atol=1e-6)
    assert jnp.array_equal(conf, ref_conf)


if __name__ == "__main__":
    key = jax.random.PRNGKey(0)
    k1, k2, k3, k4, k5, k6 = jax.random.split(key, 6)

    # Case 1: Module(batch_size=64) default, 4 classes (> 2 so metrics() applies).
    n1, k_cls1 = 64, 4
    target1 = jax.random.randint(k1, (n1,), 0, k_cls1, dtype=jnp.int32)
    pred1 = jax.random.randint(k2, (n1,), 0, k_cls1, dtype=jnp.int32)
    _check(pred1, target1, k_cls1)

    # Case 2: exercises the N-grid (2 tiles) and a ragged last tile.
    n2, k_cls2 = 3000, 5
    target2 = jax.random.randint(k3, (n2,), 0, k_cls2, dtype=jnp.int32)
    pred2 = jax.random.randint(k4, (n2,), 0, k_cls2, dtype=jnp.int32)
    _check(pred2, target2, k_cls2)

    # Case 3: binary classification (K == 2) — metrics() returns {} like the reference.
    n3, k_cls3 = 64, 2
    target3 = jax.random.randint(k5, (n3,), 0, k_cls3, dtype=jnp.int32)
    pred3 = jax.random.randint(k6, (n3,), 0, k_cls3, dtype=jnp.int32)
    _check(pred3, target3, k_cls3)

    print("KERNEL_OK")
</pallas_src>

<mosaic_0001>
module attributes {stable_mosaic.version = 11 : i64} {
  func.func @_confusion_kernel(%arg0: i32, %arg1: memref<1xi32, #tpu.memory_space<smem>>, %arg2: memref<1x2048xi32, #tpu.memory_space<vmem>>, %arg3: memref<1x2048xi32, #tpu.memory_space<vmem>>, %arg4: memref<8x8xi32, #tpu.memory_space<vmem>>) attributes {dimension_semantics = [#tpu.dimension_semantics<arbitrary>], iteration_bounds = array<i64: 1>, scalar_prefetch = 1 : i64, scratch_operands = 0 : i64, tpu.core_type = #tpu.core_type<tc>, window_params = [{transform_indices = @transform_0, window_bounds = array<i64: 1, 2048>}, {transform_indices = @transform_1, window_bounds = array<i64: 1, 2048>}, {pipeline_mode = #tpu.pipeline_mode<synchronous>, transform_indices = @transform_2, window_bounds = array<i64: 8, 8>}]} {
    %c0_i32 = arith.constant 0 : i32
    %0 = arith.cmpi eq, %arg0, %c0_i32 : i32
    %1 = arith.extui %0 : i1 to i32
    %c0_i32_0 = arith.constant 0 : i32
    %2 = arith.cmpi ne, %1, %c0_i32_0 : i32
    scf.if %2 {
      %c0_i32_9 = arith.constant 0 : i32
      %30 = vector.broadcast %c0_i32_9 : i32 to vector<8x8xi32>
      %c0_10 = arith.constant 0 : index
      %c0_11 = arith.constant 0 : index
      %31 = vector.load %arg4[%c0_10, %c0_11] : memref<8x8xi32, #tpu.memory_space<vmem>>, vector<8x8xi32>
      tpu.vector_store %arg4[%c0_10, %c0_11], %30 {strides = array<i32>} : memref<8x8xi32, #tpu.memory_space<vmem>>, vector<8x8xi32>,
    } else {
    }
    %c0 = arith.constant 0 : index
    %c0_1 = arith.constant 0 : index
    %3 = vector.load %arg2[%c0, %c0_1] : memref<1x2048xi32, #tpu.memory_space<vmem>>, vector<1x2048xi32>
    %c0_2 = arith.constant 0 : index
    %c0_3 = arith.constant 0 : index
    %4 = vector.load %arg3[%c0_2, %c0_3] : memref<1x2048xi32, #tpu.memory_space<vmem>>, vector<1x2048xi32>
    %5 = tpu.iota {dimensions = array<i32: 1>} : vector<1x2048xi32>
    %c2048_i32 = arith.constant 2048 : i32
    %6 = arith.muli %arg0, %c2048_i32 : i32
    %7 = vector.broadcast %6 : i32 to vector<1x2048xi32>
    %8 = arith.addi %7, %5 : vector<1x2048xi32>
    %c0_4 = arith.constant 0 : index
    %9 = memref.load %arg1[%c0_4] : memref<1xi32, #tpu.memory_space<smem>>
    %10 = vector.broadcast %9 : i32 to vector<1x2048xi32>
    %11 = arith.cmpi slt, %8, %10 : vector<1x2048xi32>
    %12 = tpu.iota {dimensions = array<i32: 0>} : vector<8x2048xi32>
    %13 = vector.broadcast %3 : vector<1x2048xi32> to vector<8x2048xi32>
    %14 = arith.cmpi eq, %13, %12 : vector<8x2048xi32>
    %15 = vector.broadcast %11 : vector<1x2048xi1> to vector<8x2048xi1>
    %16 = arith.andi %14, %15 : vector<8x2048xi1>
    %17 = arith.extui %16 : vector<8x2048xi1> to vector<8x2048xi32>
    %18 = arith.sitofp %17 : vector<8x2048xi32> to vector<8x2048xf32>
    %19 = arith.truncf %18 : vector<8x2048xf32> to vector<8x2048xbf16>
    %20 = vector.broadcast %4 : vector<1x2048xi32> to vector<8x2048xi32>
    %21 = arith.cmpi eq, %20, %12 : vector<8x2048xi32>
    %22 = arith.extui %21 : vector<8x2048xi1> to vector<8x2048xi32>
    %23 = arith.sitofp %22 : vector<8x2048xi32> to vector<8x2048xf32>
    %24 = arith.truncf %23 : vector<8x2048xf32> to vector<8x2048xbf16>
    %cst = arith.constant dense<0.000000e+00> : vector<8x8xf32>
    %25 = tpu.matmul %19, %24, %cst {dimension_numbers = #tpu.dot_dimension_numbers<[1], [1], [0], [0], [0, 0, 1, 0], [], []>} : vector<8x2048xbf16>, vector<8x2048xbf16>, vector<8x8xf32> -> vector<8x8xf32>
    %c0_5 = arith.constant 0 : index
    %c0_6 = arith.constant 0 : index
    %26 = vector.load %arg4[%c0_5, %c0_6] : memref<8x8xi32, #tpu.memory_space<vmem>>, vector<8x8xi32>
    %27 = arith.fptosi %25 : vector<8x8xf32> to vector<8x8xi32>
    %28 = arith.addi %26, %27 : vector<8x8xi32>
    %c0_7 = arith.constant 0 : index
    %c0_8 = arith.constant 0 : index
    %29 = vector.load %arg4[%c0_7, %c0_8] : memref<8x8xi32, #tpu.memory_space<vmem>>, vector<8x8xi32>
    tpu.vector_store %arg4[%c0_7, %c0_8], %28 {strides = array<i32>} : memref<8x8xi32, #tpu.memory_space<vmem>>, vector<8x8xi32>,
    return
  }
  func.func @transform_0(%arg0: i32, %arg1: memref<1xi32, #tpu.memory_space<smem>>) -> (i32, i32) {
    %c0_i32 = arith.constant 0 : i32
    %c0_i32_0 = arith.constant 0 : i32
    return %c0_i32, %arg0 : i32, i32
  }
  func.func @transform_1(%arg0: i32, %arg1: memref<1xi32, #tpu.memory_space<smem>>) -> (i32, i32) {
    %c0_i32 = arith.constant 0 : i32
    %c0_i32_0 = arith.constant 0 : i32
    return %c0_i32, %arg0 : i32, i32
  }
  func.func @transform_2(%arg0: i32, %arg1: memref<1xi32, #tpu.memory_space<smem>>) -> (i32, i32) {
    %c0_i32 = arith.constant 0 : i32
    %c0_i32_0 = arith.constant 0 : i32
    %c0_i32_1 = arith.constant 0 : i32
    return %c0_i32, %c0_i32_0 : i32, i32
  }
}

</mosaic_0001>

<llo_original>
// kernel: result_evaluation_mini_batch.1
$region0: #{result_evaluation_mini_batch.1}
  #allocation0 [shape = 'u32[]', space=smem, size = 0x4, offset = 0x4, fixed_abs, tag = 'smem constant byte address 0x4 - core index']
  #allocation1 [shape = 'u32[144,128]{1,0:T(1,128)}', space=vmem, size = 0x12000, scoped, tag = 'internal scratch']
  #allocation2 [shape = 's32[1]{0}', space=sflag, size = 0x4, scoped, tag = 'scoped memory for result_evaluation_mini_batch.1']
  #allocation3 [shape = 's32[1]{0:T(128)S(6)}', space=smem, size = 0x200, scoped, tag = 'prefetched SMEM operand 0']
  %s0 = inlined_call_operand.<no memory space> [shape: s32[1], index: 0, kind: input, shape index: {}]
  %s1 = inlined_call_operand.vmem [shape: s32[1,64], index: 1, kind: input, shape index: {}]
  %s2 = inlined_call_operand.vmem [shape: s32[1,64], index: 2, kind: input, shape index: {}]
  %s3 = inlined_call_operand.vmem [shape: s32[8,8], index: 3, kind: output, shape index: {}]
  %s4 = sld [smem:[#allocation0]]
  $region22: #{result_evaluation_mini_batch.1} parent=0
    _
  %s6 = ssub.s32 1, %s4
  %s7 = scalar_select 0, %s6, %s4
  %8 = sst [smem:[#allocation3]] %s0
  // Predicated region
  $region2: #{result_evaluation_mini_batch.1} parent=0 // pred_check
    _
  $region3: #{result_evaluation_mini_batch.1} parent=0 // pred_check_branch
    %10 = sbr.rel (0) target = $region5
  $region4: #{result_evaluation_mini_batch.1} parent=0 // pred_region
    _
  $region5: #{result_evaluation_mini_batch.1} parent=0 // pred_fallthru
    _
  // Predicated region
  $region6: #{result_evaluation_mini_batch.1} parent=0 // pred_check
    _
  $region7: #{result_evaluation_mini_batch.1} parent=0 // pred_check_branch
    %12 = sbr.rel (0) target = $region9
  $region8: #{result_evaluation_mini_batch.1} parent=0 // pred_region
    _
  $region9: #{result_evaluation_mini_batch.1} parent=0 // pred_fallthru
    _
  %p14 = scmp.eq.s32.totalorder 0, 0
  // Predicated region
  $region10: #{result_evaluation_mini_batch.1} parent=0 // pred_check
    %p15 = pneg %p14
  $region11: #{result_evaluation_mini_batch.1} parent=0 // pred_check_branch
    %17 = sbr.rel (%p15) target = $region13
  $region12: #{result_evaluation_mini_batch.1} parent=0 // pred_region
    %vm18 = vcmask 64512
    %19 = vst.msk [vmem:[%s3] sm:$0xff] %vm18, 0
  $region13: #{result_evaluation_mini_batch.1} parent=0 // pred_fallthru
    _
  %v20 = vld [vmem:[%s1] sm:$0xff]
  %v21 = vld [vmem:[%s1 + $0x8] sm:$0xff]
  %v22 = vld [vmem:[%s2] sm:$0xff]
  %v23 = vld [vmem:[%s2 + $0x8] sm:$0xff]
  %v24 = vlaneseq
  %v25 = vand.u32 %v24, 127
  %v26 = vadd.s32 %v25, 128
  %v27 = vadd.s32 %v25, 256
  %v28 = vadd.s32 %v25, 384
  %v29 = vadd.s32 %v25, 512
  %v30 = vadd.s32 %v25, 640
  %v31 = vadd.s32 %v25, 768
  %v32 = vadd.s32 %v25, 896
  %v33 = vadd.s32 %v25, 1024
  %v34 = vadd.s32 %v25, 1152
  %v35 = vadd.s32 %v25, 1280
  %v36 = vadd.s32 %v25, 1408
  %v37 = vadd.s32 %v25, 1536
  %v38 = vadd.s32 %v25, 1664
  %v39 = vadd.s32 %v25, 1792
  %v40 = vadd.s32 %v25, 1920
  %s41 = smul.u32 0, 2048
  %v42 = vstv %s41
  %v43 = vadd.s32 %v42, %v25
  %v44 = vadd.s32 %v42, %v26
  %v45 = vadd.s32 %v42, %v27
  %v46 = vadd.s32 %v42, %v28
  %v47 = vadd.s32 %v42, %v29
  %v48 = vadd.s32 %v42, %v30
  %v49 = vadd.s32 %v42, %v31
  %v50 = vadd.s32 %v42, %v32
  %v51 = vadd.s32 %v42, %v33
  %v52 = vadd.s32 %v42, %v34
  %v53 = vadd.s32 %v42, %v35
  %v54 = vadd.s32 %v42, %v36
  %v55 = vadd.s32 %v42, %v37
  %v56 = vadd.s32 %v42, %v38
  %v57 = vadd.s32 %v42, %v39
  %v58 = vadd.s32 %v42, %v40
  %s59 = sld [smem:[#allocation3]]
  %v60 = vstv %s59
  %vm61 = vcmp.lt.s32.totalorder %v43, %v60
  %vm62 = vcmp.lt.s32.totalorder %v44, %v60
  %vm63 = vcmp.lt.s32.totalorder %v45, %v60
  %vm64 = vcmp.lt.s32.totalorder %v46, %v60
  %vm65 = vcmp.lt.s32.totalorder %v47, %v60
  %vm66 = vcmp.lt.s32.totalorder %v48, %v60
  %vm67 = vcmp.lt.s32.totalorder %v49, %v60
  %vm68 = vcmp.lt.s32.totalorder %v50, %v60
  %vm69 = vcmp.lt.s32.totalorder %v51, %v60
  %vm70 = vcmp.lt.s32.totalorder %v52, %v60
  %vm71 = vcmp.lt.s32.totalorder %v53, %v60
  %vm72 = vcmp.lt.s32.totalorder %v54, %v60
  %vm73 = vcmp.lt.s32.totalorder %v55, %v60
  %vm74 = vcmp.lt.s32.totalorder %v56, %v60
  %vm75 = vcmp.lt.s32.totalorder %v57, %v60
  %vm76 = vcmp.lt.s32.totalorder %v58, %v60
  %v77 = vlaneseq
  %v78 = vshrl.u32 %v77, 7
  %v79 = vlaneseq
  %v80 = vshrl.u32 %v79, 7
  %v81 = vsub.s32 0, %v80
  %v82 = vrot.slane %v20, %v81
  %v83 = vlaneseq
  %v84 = vshrl.u32 %v83, 7
  %v85 = vsub.s32 1, %v84
  %v86 = vrot.slane %v20, %v85
  %v87 = vlaneseq
  %v88 = vshrl.u32 %v87, 7
  %v89 = vsub.s32 2, %v88
  %v90 = vrot.slane %v20, %v89
  %v91 = vlaneseq
  %v92 = vshrl.u32 %v91, 7
  %v93 = vsub.s32 3, %v92
  %v94 = vrot.slane %v20, %v93
  %v95 = vlaneseq
  %v96 = vshrl.u32 %v95, 7
  %v97 = vsub.s32 4, %v96
  %v98 = vrot.slane %v20, %v97
  %v99 = vlaneseq
  %v100 = vshrl.u32 %v99, 7
  %v101 = vsub.s32 5, %v100
  %v102 = vrot.slane %v20, %v101
  %v103 = vlaneseq
  %v104 = vshrl.u32 %v103, 7
  %v105 = vsub.s32 6, %v104
  %v106 = vrot.slane %v20, %v105
  %v107 = vlaneseq
  %v108 = vshrl.u32 %v107, 7
  %v109 = vsub.s32 7, %v108
  %v110 = vrot.slane %v20, %v109
  %v111 = vlaneseq
  %v112 = vshrl.u32 %v111, 7
  %v113 = vsub.s32 0, %v112
  %v114 = vrot.slane %v21, %v113
  %v115 = vlaneseq
  %v116 = vshrl.u32 %v115, 7
  %v117 = vsub.s32 1, %v116
  %v118 = vrot.slane %v21, %v117
  %v119 = vlaneseq
  %v120 = vshrl.u32 %v119, 7
  %v121 = vsub.s32 2, %v120
  %v122 = vrot.slane %v21, %v121
  %v123 = vlaneseq
  %v124 = vshrl.u32 %v123, 7
  %v125 = vsub.s32 3, %v124
  %v126 = vrot.slane %v21, %v125
  %v127 = vlaneseq
  %v128 = vshrl.u32 %v127, 7
  %v129 = vsub.s32 4, %v128
  %v130 = vrot.slane %v21, %v129
  %v131 = vlaneseq
  %v132 = vshrl.u32 %v131, 7
  %v133 = vsub.s32 5, %v132
  %v134 = vrot.slane %v21, %v133
  %v135 = vlaneseq
  %v136 = vshrl.u32 %v135, 7
  %v137 = vsub.s32 6, %v136
  %v138 = vrot.slane %v21, %v137
  %v139 = vlaneseq
  %v140 = vshrl.u32 %v139, 7
  %v141 = vsub.s32 7, %v140
  %v142 = vrot.slane %v21, %v141
  %vm143 = vcmp.eq.s32.totalorder %v82, %v78
  %vm144 = vcmp.eq.s32.totalorder %v86, %v78
  %vm145 = vcmp.eq.s32.totalorder %v90, %v78
  %vm146 = vcmp.eq.s32.totalorder %v94, %v78
  %vm147 = vcmp.eq.s32.totalorder %v98, %v78
  %vm148 = vcmp.eq.s32.totalorder %v102, %v78
  %vm149 = vcmp.eq.s32.totalorder %v106, %v78
  %vm150 = vcmp.eq.s32.totalorder %v110, %v78
  %vm151 = vcmp.eq.s32.totalorder %v114, %v78
  %vm152 = vcmp.eq.s32.totalorder %v118, %v78
  %vm153 = vcmp.eq.s32.totalorder %v122, %v78
  %vm154 = vcmp.eq.s32.totalorder %v126, %v78
  %vm155 = vcmp.eq.s32.totalorder %v130, %v78
  %vm156 = vcmp.eq.s32.totalorder %v134, %v78
  %vm157 = vcmp.eq.s32.totalorder %v138, %v78
  %vm158 = vcmp.eq.s32.totalorder %v142, %v78
  %v159 = vsel %vm61, 1, 0
  %v160 = vsel %vm62, 1, 0
  %v161 = vsel %vm63, 1, 0
  %v162 = vsel %vm64, 1, 0
  %v163 = vsel %vm65, 1, 0
  %v164 = vsel %vm66, 1, 0
  %v165 = vsel %vm67, 1, 0
  %v166 = vsel %vm68, 1, 0
  %v167 = vsel %vm69, 1, 0
  %v168 = vsel %vm70, 1, 0
  %v169 = vsel %vm71, 1, 0
  %v170 = vsel %vm72, 1, 0
  %v171 = vsel %vm73, 1, 0
  %v172 = vsel %vm74, 1, 0
  %v173 = vsel %vm75, 1, 0
  %v174 = vsel %vm76, 1, 0
  %vm175 = vcmp.eq.s32.totalorder %v159, 1
  %vm176 = vcmp.eq.s32.totalorder %v160, 1
  %vm177 = vcmp.eq.s32.totalorder %v161, 1
  %vm178 = vcmp.eq.s32.totalorder %v162, 1
  %vm179 = vcmp.eq.s32.totalorder %v163, 1
  %vm180 = vcmp.eq.s32.totalorder %v164, 1
  %vm181 = vcmp.eq.s32.totalorder %v165, 1
  %vm182 = vcmp.eq.s32.totalorder %v166, 1
  %vm183 = vcmp.eq.s32.totalorder %v167, 1
  %vm184 = vcmp.eq.s32.totalorder %v168, 1
  %vm185 = vcmp.eq.s32.totalorder %v169, 1
  %vm186 = vcmp.eq.s32.totalorder %v170, 1
  %vm187 = vcmp.eq.s32.totalorder %v171, 1
  %vm188 = vcmp.eq.s32.totalorder %v172, 1
  %vm189 = vcmp.eq.s32.totalorder %v173, 1
  %vm190 = vcmp.eq.s32.totalorder %v174, 1
  %vm191 = vmand %vm143, %vm175
  %vm192 = vmand %vm144, %vm176
  %vm193 = vmand %vm145, %vm177
  %vm194 = vmand %vm146, %vm178
  %vm195 = vmand %vm147, %vm179
  %vm196 = vmand %vm148, %vm180
  %vm197 = vmand %vm149, %vm181
  %vm198 = vmand %vm150, %vm182
  %vm199 = vmand %vm151, %vm183
  %vm200 = vmand %vm152, %vm184
  %vm201 = vmand %vm153, %vm185
  %vm202 = vmand %vm154, %vm186
  %vm203 = vmand %vm155, %vm187
  %vm204 = vmand %vm156, %vm188
  %vm205 = vmand %vm157, %vm189
  %vm206 = vmand %vm158, %vm190
  %v207 = vsel %vm191, 1, 0
  %v208 = vsel %vm192, 1, 0
  %v209 = vsel %vm193, 1, 0
  %v210 = vsel %vm194, 1, 0
  %v211 = vsel %vm195, 1, 0
  %v212 = vsel %vm196, 1, 0
  %v213 = vsel %vm197, 1, 0
  %v214 = vsel %vm198, 1, 0
  %v215 = vsel %vm199, 1, 0
  %v216 = vsel %vm200, 1, 0
  %v217 = vsel %vm201, 1, 0
  %v218 = vsel %vm202, 1, 0
  %v219 = vsel %vm203, 1, 0
  %v220 = vsel %vm204, 1, 0
  %v221 = vsel %vm205, 1, 0
  %v222 = vsel %vm206, 1, 0
  %v223 = vcvt.s32.f32 %v207
  %v224 = vcvt.s32.f32 %v208
  %v225 = vcvt.s32.f32 %v209
  %v226 = vcvt.s32.f32 %v210
  %v227 = vcvt.s32.f32 %v211
  %v228 = vcvt.s32.f32 %v212
  %v229 = vcvt.s32.f32 %v213
  %v230 = vcvt.s32.f32 %v214
  %v231 = vcvt.s32.f32 %v215
  %v232 = vcvt.s32.f32 %v216
  %v233 = vcvt.s32.f32 %v217
  %v234 = vcvt.s32.f32 %v218
  %v235 = vcvt.s32.f32 %v219
  %v236 = vcvt.s32.f32 %v220
  %v237 = vcvt.s32.f32 %v221
  %v238 = vcvt.s32.f32 %v222
  %v239 = vpack.c.bf16 %v223, %v223
  %v240 = vpack.c.bf16 %v224, %v224
  %v241 = vpack.c.bf16 %v225, %v225
  %v242 = vpack.c.bf16 %v226, %v226
  %v243 = vpack.c.bf16 %v227, %v227
  %v244 = vpack.c.bf16 %v228, %v228
  %v245 = vpack.c.bf16 %v229, %v229
  %v246 = vpack.c.bf16 %v230, %v230
  %v247 = vpack.c.bf16 %v231, %v231
  %v248 = vpack.c.bf16 %v232, %v232
  %v249 = vpack.c.bf16 %v233, %v233
  %v250 = vpack.c.bf16 %v234, %v234
  %v251 = vpack.c.bf16 %v235, %v235
  %v252 = vpack.c.bf16 %v236, %v236
  %v253 = vpack.c.bf16 %v237, %v237
  %v254 = vpack.c.bf16 %v238, %v238
  %v255 = vlaneseq
  %v256 = vshrl.u32 %v255, 7
  %v257 = vsub.s32 0, %v256
  %v258 = vrot.slane %v22, %v257
  %v259 = vlaneseq
  %v260 = vshrl.u32 %v259, 7
  %v261 = vsub.s32 1, %v260
  %v262 = vrot.slane %v22, %v261
  %v263 = vlaneseq
  %v264 = vshrl.u32 %v263, 7
  %v265 = vsub.s32 2, %v264
  %v266 = vrot.slane %v22, %v265
  %v267 = vlaneseq
  %v268 = vshrl.u32 %v267, 7
  %v269 = vsub.s32 3, %v268
  %v270 = vrot.slane %v22, %v269
  %v271 = vlaneseq
  %v272 = vshrl.u32 %v271, 7
  %v273 = vsub.s32 4, %v272
  %v274 = vrot.slane %v22, %v273
  %v275 = vlaneseq
  %v276 = vshrl.u32 %v275, 7
  %v277 = vsub.s32 5, %v276
  %v278 = vrot.slane %v22, %v277
  %v279 = vlaneseq
  %v280 = vshrl.u32 %v279, 7
  %v281 = vsub.s32 6, %v280
  %v282 = vrot.slane %v22, %v281
  %v283 = vlaneseq
  %v284 = vshrl.u32 %v283, 7
  %v285 = vsub.s32 7, %v284
  %v286 = vrot.slane %v22, %v285
  %v287 = vlaneseq
  %v288 = vshrl.u32 %v287, 7
  %v289 = vsub.s32 0, %v288
  %v290 = vrot.slane %v23, %v289
  %v291 = vlaneseq
  %v292 = vshrl.u32 %v291, 7
  %v293 = vsub.s32 1, %v292
  %v294 = vrot.slane %v23, %v293
  %v295 = vlaneseq
  %v296 = vshrl.u32 %v295, 7
  %v297 = vsub.s32 2, %v296
  %v298 = vrot.slane %v23, %v297
  %v299 = vlaneseq
  %v300 = vshrl.u32 %v299, 7
  %v301 = vsub.s32 3, %v300
  %v302 = vrot.slane %v23, %v301
  %v303 = vlaneseq
  %v304 = vshrl.u32 %v303, 7
  %v305 = vsub.s32 4, %v304
  %v306 = vrot.slane %v23, %v305
  %v307 = vlaneseq
  %v308 = vshrl.u32 %v307, 7
  %v309 = vsub.s32 5, %v308
  %v310 = vrot.slane %v23, %v309
  %v311 = vlaneseq
  %v312 = vshrl.u32 %v311, 7
  %v313 = vsub.s32 6, %v312
  %v314 = vrot.slane %v23, %v313
  %v315 = vlaneseq
  %v316 = vshrl.u32 %v315, 7
  %v317 = vsub.s32 7, %v316
  %v318 = vrot.slane %v23, %v317
  %vm319 = vcmp.eq.s32.totalorder %v258, %v78
  %vm320 = vcmp.eq.s32.totalorder %v262, %v78
  %vm321 = vcmp.eq.s32.totalorder %v266, %v78
  %vm322 = vcmp.eq.s32.totalorder %v270, %v78
  %vm323 = vcmp.eq.s32.totalorder %v274, %v78
  %vm324 = vcmp.eq.s32.totalorder %v278, %v78
  %vm325 = vcmp.eq.s32.totalorder %v282, %v78
  %vm326 = vcmp.eq.s32.totalorder %v286, %v78
  %vm327 = vcmp.eq.s32.totalorder %v290, %v78
  %vm328 = vcmp.eq.s32.totalorder %v294, %v78
  %vm329 = vcmp.eq.s32.totalorder %v298, %v78
  %vm330 = vcmp.eq.s32.totalorder %v302, %v78
  %vm331 = vcmp.eq.s32.totalorder %v306, %v78
  %vm332 = vcmp.eq.s32.totalorder %v310, %v78
  %vm333 = vcmp.eq.s32.totalorder %v314, %v78
  %vm334 = vcmp.eq.s32.totalorder %v318, %v78
  %v335 = vsel %vm319, 1, 0
  %v336 = vsel %vm320, 1, 0
  %v337 = vsel %vm321, 1, 0
  %v338 = vsel %vm322, 1, 0
  %v339 = vsel %vm323, 1, 0
  %v340 = vsel %vm324, 1, 0
  %v341 = vsel %vm325, 1, 0
  %v342 = vsel %vm326, 1, 0
  %v343 = vsel %vm327, 1, 0
  %v344 = vsel %vm328, 1, 0
  %v345 = vsel %vm329, 1, 0
  %v346 = vsel %vm330, 1, 0
  %v347 = vsel %vm331, 1, 0
  %v348 = vsel %vm332, 1, 0
  %v349 = vsel %vm333, 1, 0
  %v350 = vsel %vm334, 1, 0
  %v351 = vcvt.s32.f32 %v335
  %v352 = vcvt.s32.f32 %v336
  %v353 = vcvt.s32.f32 %v337
  %v354 = vcvt.s32.f32 %v338
  %v355 = vcvt.s32.f32 %v339
  %v356 = vcvt.s32.f32 %v340
  %v357 = vcvt.s32.f32 %v341
  %v358 = vcvt.s32.f32 %v342
  %v359 = vcvt.s32.f32 %v343
  %v360 = vcvt.s32.f32 %v344
  %v361 = vcvt.s32.f32 %v345
  %v362 = vcvt.s32.f32 %v346
  %v363 = vcvt.s32.f32 %v347
  %v364 = vcvt.s32.f32 %v348
  %v365 = vcvt.s32.f32 %v349
  %v366 = vcvt.s32.f32 %v350
  %v367 = vpack.c.bf16 %v351, %v351
  %v368 = vpack.c.bf16 %v352, %v352
  %v369 = vpack.c.bf16 %v353, %v353
  %v370 = vpack.c.bf16 %v354, %v354
  %v371 = vpack.c.bf16 %v355, %v355
  %v372 = vpack.c.bf16 %v356, %v356
  %v373 = vpack.c.bf16 %v357, %v357
  %v374 = vpack.c.bf16 %v358, %v358
  %v375 = vpack.c.bf16 %v359, %v359
  %v376 = vpack.c.bf16 %v360, %v360
  %v377 = vpack.c.bf16 %v361, %v361
  %v378 = vpack.c.bf16 %v362, %v362
  %v379 = vpack.c.bf16 %v363, %v363
  %v380 = vpack.c.bf16 %v364, %v364
  %v381 = vpack.c.bf16 %v365, %v365
  %v382 = vpack.c.bf16 %v366, %v366
  %383 = vmatprep.subr.bf16.mxu0 0
  %384 = vmatpush1.bf16.xpose.msra.mxu0 0
  %385 = vmatprep.subr.bf16.mxu0 0
  %386 = vmatpush1.bf16.xpose.msra.mxu0 0
  %387 = vmatprep.subr.bf16.mxu0 0
  %388 = vmatpush1.bf16.xpose.msra.mxu0 0
  %389 = vmatprep.subr.bf16.mxu0 0
  %390 = vmatpush1.bf16.xpose.msra.mxu0 0
  %391 = vmatprep.subr.bf16.mxu0 0
  %392 = vmatpush1.bf16.xpose.msra.mxu0 0
  %393 = vmatprep.subr.bf16.mxu0 0
  %394 = vmatpush1.bf16.xpose.msra.mxu0 0
  %395 = vmatprep.subr.bf16.mxu0 0
  %396 = vmatpush1.bf16.xpose.msra.mxu0 0
  %397 = vmatprep.subr.bf16.mxu0 %v368
  %398 = vmatpush1.bf16.xpose.msra.mxu0 %v367
  %399 = vmatprep.subr.bf16.mxu0 0
  %400 = vmatpush2.bf16.xpose.msra.mxu0 0
  %401 = vmatprep.subr.bf16.mxu0 0
  %402 = vmatpush2.bf16.xpose.msra.mxu0 0
  %403 = vmatprep.subr.bf16.mxu0 0
  %404 = vmatpush2.bf16.xpose.msra.mxu0 0
  %405 = vmatprep.subr.bf16.mxu0 0
  %406 = vmatpush2.bf16.xpose.msra.mxu0 0
  %407 = vmatprep.subr.bf16.mxu0 0
  %408 = vmatpush2.bf16.xpose.msra.mxu0 0
  %409 = vmatprep.subr.bf16.mxu0 0
  %410 = vmatpush2.bf16.xpose.msra.mxu0 0
  %411 = vmatprep.subr.bf16.mxu0 0
  %412 = vmatpush2.bf16.xpose.msra.mxu0 0
  %413 = vmatprep.subr.bf16.mxu0 0
  %414 = vmatpush2.bf16.xpose.msra.mxu0 0
  %415 = vmatprep.mubr.bf16.mxu0 %v240
  %416 = vmatmul.mubr.bf16.gmra.mxu0 %v239
  %v417 = vpop.f32.mrf.mxu0
  %v418 = vadd.f32 0.0, %v417
  %v419 = vpop.f32.mrf.mxu0
  %v420 = vpop.f32.mrf.mxu0
  %v421 = vpop.f32.mrf.mxu0
  %422 = vdwg.mxu0
  %423 = vmatprep.subr.bf16.mxu0 0
  %424 = vmatpush1.bf16.xpose.msra.mxu0 0
  %425 = vmatprep.subr.bf16.mxu0 0
  %426 = vmatpush1.bf16.xpose.msra.mxu0 0
  %427 = vmatprep.subr.bf16.mxu0 0
  %428 = vmatpush1.bf16.xpose.msra.mxu0 0
  %429 = vmatprep.subr.bf16.mxu0 0
  %430 = vmatpush1.bf16.xpose.msra.mxu0 0
  %431 = vmatprep.subr.bf16.mxu0 0
  %432 = vmatpush1.bf16.xpose.msra.mxu0 0
  %433 = vmatprep.subr.bf16.mxu0 0
  %434 = vmatpush1.bf16.xpose.msra.mxu0 0
  %435 = vmatprep.subr.bf16.mxu0 0
  %436 = vmatpush1.bf16.xpose.msra.mxu0 0
  %437 = vmatprep.subr.bf16.mxu0 %v370
  %438 = vmatpush1.bf16.xpose.msra.mxu0 %v369
  %439 = vmatprep.subr.bf16.mxu0 0
  %440 = vmatpush2.bf16.xpose.msra.mxu0 0
  %441 = vmatprep.subr.bf16.mxu0 0
  %442 = vmatpush2.bf16.xpose.msra.mxu0 0
  %443 = vmatprep.subr.bf16.mxu0 0
  %444 = vmatpush2.bf16.xpose.msra.mxu0 0
  %445 = vmatprep.subr.bf16.mxu0 0
  %446 = vmatpush2.bf16.xpose.msra.mxu0 0
  %447 = vmatprep.subr.bf16.mxu0 0
  %448 = vmatpush2.bf16.xpose.msra.mxu0 0
  %449 = vmatprep.subr.bf16.mxu0 0
  %450 = vmatpush2.bf16.xpose.msra.mxu0 0
  %451 = vmatprep.subr.bf16.mxu0 0
  %452 = vmatpush2.bf16.xpose.msra.mxu0 0
  %453 = vmatprep.subr.bf16.mxu0 0
  %454 = vmatpush2.bf16.xpose.msra.mxu0 0
  %455 = vmatprep.mubr.bf16.mxu0 %v242
  %456 = vmatmul.mubr.bf16.gmra.mxu0 %v241
  %v457 = vpop.f32.mrf.mxu0
  %v458 = vadd.f32 %v418, %v457
  %v459 = vpop.f32.mrf.mxu0
  %v460 = vpop.f32.mrf.mxu0
  %v461 = vpop.f32.mrf.mxu0
  %462 = vdwg.mxu0
  %463 = vmatprep.subr.bf16.mxu0 0
  %464 = vmatpush1.bf16.xpose.msra.mxu0 0
  %465 = vmatprep.subr.bf16.mxu0 0
  %466 = vmatpush1.bf16.xpose.msra.mxu0 0
  %467 = vmatprep.subr.bf16.mxu0 0
  %468 = vmatpush1.bf16.xpose.msra.mxu0 0
  %469 = vmatprep.subr.bf16.mxu0 0
  %470 = vmatpush1.bf16.xpose.msra.mxu0 0
  %471 = vmatprep.subr.bf16.mxu0 0
  %472 = vmatpush1.bf16.xpose.msra.mxu0 0
  %473 = vmatprep.subr.bf16.mxu0 0
  %474 = vmatpush1.bf16.xpose.msra.mxu0 0
  %475 = vmatprep.subr.bf16.mxu0 0
  %476 = vmatpush1.bf16.xpose.msra.mxu0 0
  %477 = vmatprep.subr.bf16.mxu0 %v372
  %478 = vmatpush1.bf16.xpose.msra.mxu0 %v371
  %479 = vmatprep.subr.bf16.mxu0 0
  %480 = vmatpush2.bf16.xpose.msra.mxu0 0
  %481 = vmatprep.subr.bf16.mxu0 0
  %482 = vmatpush2.bf16.xpose.msra.mxu0 0
  %483 = vmatprep.subr.bf16.mxu0 0
  %484 = vmatpush2.bf16.xpose.msra.mxu0 0
  %485 = vmatprep.subr.bf16.mxu0 0
  %486 = vmatpush2.bf16.xpose.msra.mxu0 0
  %487 = vmatprep.subr.bf16.mxu0 0
  %488 = vmatpush2.bf16.xpose.msra.mxu0 0
  %489 = vmatprep.subr.bf16.mxu0 0
  %490 = vmatpush2.bf16.xpose.msra.mxu0 0
  %491 = vmatprep.subr.bf16.mxu0 0
  %492 = vmatpush2.bf16.xpose.msra.mxu0 0
  %493 = vmatprep.subr.bf16.mxu0 0
  %494 = vmatpush2.bf16.xpose.msra.mxu0 0
  %495 = vmatprep.mubr.bf16.mxu0 %v244
  %496 = vmatmul.mubr.bf16.gmra.mxu0 %v243
  %v497 = vpop.f32.mrf.mxu0
  %v498 = vadd.f32 %v458, %v497
  %v499 = vpop.f32.mrf.mxu0
  %v500 = vpop.f32.mrf.mxu0
  %v501 = vpop.f32.mrf.mxu0
  %502 = vdwg.mxu0
  %503 = vmatprep.subr.bf16.mxu0 0
  %504 = vmatpush1.bf16.xpose.msra.mxu0 0
  %505 = vmatprep.subr.bf16.mxu0 0
  %506 = vmatpush1.bf16.xpose.msra.mxu0 0
  %507 = vmatprep.subr.bf16.mxu0 0
  %508 = vmatpush1.bf16.xpose.msra.mxu0 0
  %509 = vmatprep.subr.bf16.mxu0 0
  %510 = vmatpush1.bf16.xpose.msra.mxu0 0
  %511 = vmatprep.subr.bf16.mxu0 0
  %512 = vmatpush1.bf16.xpose.msra.mxu0 0
  %513 = vmatprep.subr.bf16.mxu0 0
  %514 = vmatpush1.bf16.xpose.msra.mxu0 0
  %515 = vmatprep.subr.bf16.mxu0 0
  %516 = vmatpush1.bf16.xpose.msra.mxu0 0
  %517 = vmatprep.subr.bf16.mxu0 %v374
  %518 = vmatpush1.bf16.xpose.msra.mxu0 %v373
  %519 = vmatprep.subr.bf16.mxu0 0
  %520 = vmatpush2.bf16.xpose.msra.mxu0 0
  %521 = vmatprep.subr.bf16.mxu0 0
  %522 = vmatpush2.bf16.xpose.msra.mxu0 0
  %523 = vmatprep.subr.bf16.mxu0 0
  %524 = vmatpush2.bf16.xpose.msra.mxu0 0
  %525 = vmatprep.subr.bf16.mxu0 0
  %526 = vmatpush2.bf16.xpose.msra.mxu0 0
  %527 = vmatprep.subr.bf16.mxu0 0
  %528 = vmatpush2.bf16.xpose.msra.mxu0 0
  %529 = vmatprep.subr.bf16.mxu0 0
  %530 = vmatpush2.bf16.xpose.msra.mxu0 0
  %531 = vmatprep.subr.bf16.mxu0 0
  %532 = vmatpush2.bf16.xpose.msra.mxu0 0
  %533 = vmatprep.subr.bf16.mxu0 0
  %534 = vmatpush2.bf16.xpose.msra.mxu0 0
  %535 = vmatprep.mubr.bf16.mxu0 %v246
  %536 = vmatmul.mubr.bf16.gmra.mxu0 %v245
  %v537 = vpop.f32.mrf.mxu0
  %v538 = vadd.f32 %v498, %v537
  %v539 = vpop.f32.mrf.mxu0
  %v540 = vpop.f32.mrf.mxu0
  %v541 = vpop.f32.mrf.mxu0
  %542 = vdwg.mxu0
  %543 = vmatprep.subr.bf16.mxu0 0
  %544 = vmatpush1.bf16.xpose.msra.mxu0 0
  %545 = vmatprep.subr.bf16.mxu0 0
  %546 = vmatpush1.bf16.xpose.msra.mxu0 0
  %547 = vmatprep.subr.bf16.mxu0 0
  %548 = vmatpush1.bf16.xpose.msra.mxu0 0
  %549 = vmatprep.subr.bf16.mxu0 0
  %550 = vmatpush1.bf16.xpose.msra.mxu0 0
  %551 = vmatprep.subr.bf16.mxu0 0
  %552 = vmatpush1.bf16.xpose.msra.mxu0 0
  %553 = vmatprep.subr.bf16.mxu0 0
  %554 = vmatpush1.bf16.xpose.msra.mxu0 0
  %555 = vmatprep.subr.bf16.mxu0 0
  %556 = vmatpush1.bf16.xpose.msra.mxu0 0
  %557 = vmatprep.subr.bf16.mxu0 %v376
  %558 = vmatpush1.bf16.xpose.msra.mxu0 %v375
  %559 = vmatprep.subr.bf16.mxu0 0
  %560 = vmatpush2.bf16.xpose.msra.mxu0 0
  %561 = vmatprep.subr.bf16.mxu0 0
  %562 = vmatpush2.bf16.xpose.msra.mxu0 0
  %563 = vmatprep.subr.bf16.mxu0 0
  %564 = vmatpush2.bf16.xpose.msra.mxu0 0
  %565 = vmatprep.subr.bf16.mxu0 0
  %566 = vmatpush2.bf16.xpose.msra.mxu0 0
  %567 = vmatprep.subr.bf16.mxu0 0
  %568 = vmatpush2.bf16.xpose.msra.mxu0 0
  %569 = vmatprep.subr.bf16.mxu0 0
  %570 = vmatpush2.bf16.xpose.msra.mxu0 0
  %571 = vmatprep.subr.bf16.mxu0 0
  %572 = vmatpush2.bf16.xpose.msra.mxu0 0
  %573 = vmatprep.subr.bf16.mxu0 0
  %574 = vmatpush2.bf16.xpose.msra.mxu0 0
  %575 = vmatprep.mubr.bf16.mxu0 %v248
  %576 = vmatmul.mubr.bf16.gmra.mxu0 %v247
  %v577 = vpop.f32.mrf.mxu0
  %v578 = vadd.f32 %v538, %v577
  %v579 = vpop.f32.mrf.mxu0
  %v580 = vpop.f32.mrf.mxu0
  %v581 = vpop.f32.mrf.mxu0
  %582 = vdwg.mxu0
  %583 = vmatprep.subr.bf16.mxu0 0
  %584 = vmatpush1.bf16.xpose.msra.mxu0 0
  %585 = vmatprep.subr.bf16.mxu0 0
  %586 = vmatpush1.bf16.xpose.msra.mxu0 0
  %587 = vmatprep.subr.bf16.mxu0 0
  %588 = vmatpush1.bf16.xpose.msra.mxu0 0
  %589 = vmatprep.subr.bf16.mxu0 0
  %590 = vmatpush1.bf16.xpose.msra.mxu0 0
  %591 = vmatprep.subr.bf16.mxu0 0
  %592 = vmatpush1.bf16.xpose.msra.mxu0 0
  %593 = vmatprep.subr.bf16.mxu0 0
  %594 = vmatpush1.bf16.xpose.msra.mxu0 0
  %595 = vmatprep.subr.bf16.mxu0 0
  %596 = vmatpush1.bf16.xpose.msra.mxu0 0
  %597 = vmatprep.subr.bf16.mxu0 %v378
  %598 = vmatpush1.bf16.xpose.msra.mxu0 %v377
  %599 = vmatprep.subr.bf16.mxu0 0
  %600 = vmatpush2.bf16.xpose.msra.mxu0 0
  %601 = vmatprep.subr.bf16.mxu0 0
  %602 = vmatpush2.bf16.xpose.msra.mxu0 0
  %603 = vmatprep.subr.bf16.mxu0 0
  %604 = vmatpush2.bf16.xpose.msra.mxu0 0
  %605 = vmatprep.subr.bf16.mxu0 0
  %606 = vmatpush2.bf16.xpose.msra.mxu0 0
  %607 = vmatprep.subr.bf16.mxu0 0
  %608 = vmatpush2.bf16.xpose.msra.mxu0 0
  %609 = vmatprep.subr.bf16.mxu0 0
  %610 = vmatpush2.bf16.xpose.msra.mxu0 0
  %611 = vmatprep.subr.bf16.mxu0 0
  %612 = vmatpush2.bf16.xpose.msra.mxu0 0
  %613 = vmatprep.subr.bf16.mxu0 0
  %614 = vmatpush2.bf16.xpose.msra.mxu0 0
  %615 = vmatprep.mubr.bf16.mxu0 %v250
  %616 = vmatmul.mubr.bf16.gmra.mxu0 %v249
  %v617 = vpop.f32.mrf.mxu0
  %v618 = vadd.f32 %v578, %v617
  %v619 = vpop.f32.mrf.mxu0
  %v620 = vpop.f32.mrf.mxu0
  %v621 = vpop.f32.mrf.mxu0
  %622 = vdwg.mxu0
  %623 = vmatprep.subr.bf16.mxu0 0
  %624 = vmatpush1.bf16.xpose.msra.mxu0 0
  %625 = vmatprep.subr.bf16.mxu0 0
  %626 = vmatpush1.bf16.xpose.msra.mxu0 0
  %627 = vmatprep.subr.bf16.mxu0 0
  %628 = vmatpush1.bf16.xpose.msra.mxu0 0
  %629 = vmatprep.subr.bf16.mxu0 0
  %630 = vmatpush1.bf16.xpose.msra.mxu0 0
  %631 = vmatprep.subr.bf16.mxu0 0
  %632 = vmatpush1.bf16.xpose.msra.mxu0 0
  %633 = vmatprep.subr.bf16.mxu0 0
  %634 = vmatpush1.bf16.xpose.msra.mxu0 0
  %635 = vmatprep.subr.bf16.mxu0 0
  %636 = vmatpush1.bf16.xpose.msra.mxu0 0
  %637 = vmatprep.subr.bf16.mxu0 %v380
  %638 = vmatpush1.bf16.xpose.msra.mxu0 %v379
  %639 = vmatprep.subr.bf16.mxu0 0
  %640 = vmatpush2.bf16.xpose.msra.mxu0 0
  %641 = vmatprep.subr.bf16.mxu0 0
  %642 = vmatpush2.bf16.xpose.msra.mxu0 0
  %643 = vmatprep.subr.bf16.mxu0 0
  %644 = vmatpush2.bf16.xpose.msra.mxu0 0
  %645 = vmatprep.subr.bf16.mxu0 0
  %646 = vmatpush2.bf16.xpose.msra.mxu0 0
  %647 = vmatprep.subr.bf16.mxu0 0
  %648 = vmatpush2.bf16.xpose.msra.mxu0 0
  %649 = vmatprep.subr.bf16.mxu0 0
  %650 = vmatpush2.bf16.xpose.msra.mxu0 0
  %651 = vmatprep.subr.bf16.mxu0 0
  %652 = vmatpush2.bf16.xpose.msra.mxu0 0
  %653 = vmatprep.subr.bf16.mxu0 0
  %654 = vmatpush2.bf16.xpose.msra.mxu0 0
  %655 = vmatprep.mubr.bf16.mxu0 %v252
  %656 = vmatmul.mubr.bf16.gmra.mxu0 %v251
  %v657 = vpop.f32.mrf.mxu0
  %v658 = vadd.f32 %v618, %v657
  %v659 = vpop.f32.mrf.mxu0
  %v660 = vpop.f32.mrf.mxu0
  %v661 = vpop.f32.mrf.mxu0
  %662 = vdwg.mxu0
  %663 = vmatprep.subr.bf16.mxu0 0
  %664 = vmatpush1.bf16.xpose.msra.mxu0 0
  %665 = vmatprep.subr.bf16.mxu0 0
  %666 = vmatpush1.bf16.xpose.msra.mxu0 0
  %667 = vmatprep.subr.bf16.mxu0 0
  %668 = vmatpush1.bf16.xpose.msra.mxu0 0
  %669 = vmatprep.subr.bf16.mxu0 0
  %670 = vmatpush1.bf16.xpose.msra.mxu0 0
  %671 = vmatprep.subr.bf16.mxu0 0
  %672 = vmatpush1.bf16.xpose.msra.mxu0 0
  %673 = vmatprep.subr.bf16.mxu0 0
  %674 = vmatpush1.bf16.xpose.msra.mxu0 0
  %675 = vmatprep.subr.bf16.mxu0 0
  %676 = vmatpush1.bf16.xpose.msra.mxu0 0
  %677 = vmatprep.subr.bf16.mxu0 %v382
  %678 = vmatpush1.bf16.xpose.msra.mxu0 %v381
  %679 = vmatprep.subr.bf16.mxu0 0
  %680 = vmatpush2.bf16.xpose.msra.mxu0 0
  %681 = vmatprep.subr.bf16.mxu0 0
  %682 = vmatpush2.bf16.xpose.msra.mxu0 0
  %683 = vmatprep.subr.bf16.mxu0 0
  %684 = vmatpush2.bf16.xpose.msra.mxu0 0
  %685 = vmatprep.subr.bf16.mxu0 0
  %686 = vmatpush2.bf16.xpose.msra.mxu0 0
  %687 = vmatprep.subr.bf16.mxu0 0
  %688 = vmatpush2.bf16.xpose.msra.mxu0 0
  %689 = vmatprep.subr.bf16.mxu0 0
  %690 = vmatpush2.bf16.xpose.msra.mxu0 0
  %691 = vmatprep.subr.bf16.mxu0 0
  %692 = vmatpush2.bf16.xpose.msra.mxu0 0
  %693 = vmatprep.subr.bf16.mxu0 0
  %694 = vmatpush2.bf16.xpose.msra.mxu0 0
  %695 = vmatprep.mubr.bf16.mxu0 %v254
  %696 = vmatmul.mubr.bf16.gmra.mxu0 %v253
  %v697 = vpop.f32.mrf.mxu0
  %v698 = vadd.f32 %v658, %v697
  %v699 = vpop.f32.mrf.mxu0
  %v700 = vpop.f32.mrf.mxu0
  %v701 = vpop.f32.mrf.mxu0
  %702 = vdwg.mxu0
  %v703 = vld [vmem:[%s3] sm:$0xff]
  %v704 = vcvt.f32.s32.to.zero.pseudo %v698
  %v705 = vadd.s32 %v703, %v704
  %vm706 = vcmask 64512
  %707 = vst.msk [vmem:[%s3] sm:$0xff] %vm706, %v705
  // Predicated region
  $region14: #{result_evaluation_mini_batch.1} parent=0 // pred_check
    _
  $region15: #{result_evaluation_mini_batch.1} parent=0 // pred_check_branch
    %709 = sbr.rel (0) target = $region17
  $region16: #{result_evaluation_mini_batch.1} parent=0 // pred_region
    _
  $region17: #{result_evaluation_mini_batch.1} parent=0 // pred_fallthru
    _
  // Predicated region
  $region18: #{result_evaluation_mini_batch.1} parent=0 // pred_check
    _
  $region19: #{result_evaluation_mini_batch.1} parent=0 // pred_check_branch
    %711 = sbr.rel (0) target = $region21
  $region20: #{result_evaluation_mini_batch.1} parent=0 // pred_region
    _
  $region21: #{result_evaluation_mini_batch.1} parent=0 // pred_fallthru
    _

</llo_original>
